<compile_context>
chip_gen: v7x
topology: tpu7x:2x2x1
jax: 0.10.0
libtpu: 0.0.40
codegen_flags: <defaults>
</compile_context>

<pallas_src>
import functools

import jax
import jax.numpy as jnp
from jax.experimental import pallas as pl
from jax.experimental.pallas import tpu as pltpu


def parse_graph_kernel(node_ref, graph_ref,
                       w1_ref, b1_ref, w2_ref, b2_ref,
                       wo1_ref, wo2_ref, bo_ref,
                       out_ref, *, bt, n, hp):
    # ---- graph block straight from HBM (bf16; no extra in-kernel copy) ----
    g = graph_ref[...]                                           # (bt, N, N)
    g_bf = g if g.dtype == jnp.bfloat16 else g.astype(jnp.bfloat16)

    # ---- degrees via MXU ones-matvec, f32 accumulation (no f32 graph temp) ----
    ones_col = jnp.ones((bt, n, 1), dtype=jnp.bfloat16)
    d = jnp.einsum('bnm,bmk->bnk', g_bf, ones_col,
                   preferred_element_type=jnp.float32)           # (bt, N, 1)
    # d^-0.5: inf for isolated nodes, same semantics as torch.pow(d, -0.5).
    dinv = jax.lax.rsqrt(d)

    x = node_ref[...]                                            # (bt*N, Hp) f32
    x3 = x.reshape(bt, n, hp)

    def norm_hop(v3):
        # D^-1/2 G D^-1/2 @ v  ==  dinv * (G @ (dinv * v))
        vs = (dinv * v3).astype(jnp.bfloat16)
        gv = jnp.einsum('bnm,bmh->bnh', g_bf, vs,
                        preferred_element_type=jnp.float32)
        return dinv * gv

    # ---- node_fc1: relu((Gn @ x) @ W1^T + b1) ----
    gx = norm_hop(x3).reshape(bt * n, hp)
    h1 = jnp.maximum(
        jnp.dot(gx.astype(jnp.bfloat16), w1_ref[...],
                preferred_element_type=jnp.float32) + b1_ref[...], 0.0)

    # ---- node_fc2: relu((Gn @ h1) @ W2^T + b2) ----
    gh = norm_hop(h1.reshape(bt, n, hp)).reshape(bt * n, hp)
    h2 = jnp.maximum(
        jnp.dot(gh.astype(jnp.bfloat16), w2_ref[...],
                preferred_element_type=jnp.float32) + b2_ref[...], 0.0)

    # ---- node_out on concat(x, h2): split-weight formulation (no concat) ----
    out = (jnp.dot(x.astype(jnp.bfloat16), wo1_ref[...],
                   preferred_element_type=jnp.float32)
           + jnp.dot(h2.astype(jnp.bfloat16), wo2_ref[...],
                     preferred_element_type=jnp.float32)
           + bo_ref[...])
    out_ref[...] = jnp.maximum(out, 0.0).astype(out_ref.dtype)


def _round_up(x, m):
    return (x + m - 1) // m * m


def _working_set_bytes(bt, n, hp):
    graph = 2 * bt * n * n * 2            # bf16 graph block, double-buffered
    node_io = 2 * 2 * bt * n * hp * 4     # f32 node in + out blocks, double-buffered
    temps = 6 * bt * n * hp * 4           # f32 activations / intermediates
    weights = 4 * hp * hp * 2 + 3 * hp * 4
    return graph + node_io + temps + weights


def _pick_batch_tile(B, N, Hp):
    """Largest divisor bt of B such that:
       * nb = B // bt >= 2 whenever B >= 2  (megacore sharding on v7x),
       * fused rows bt*N <= ~1024 (HBM-roofline-friendly tile size),
       * bt*N is sublane-aligned (multiple of 8),
       * the estimated working set fits a conservative VMEM budget."""
    row_target = 1024
    vmem_budget = 24 << 20
    best = None
    for cand in range(1, B + 1):
        if B % cand:
            continue
        if B >= 2 and B // cand < 2:
            continue
        if (cand * N) % 8:
            continue
        if cand * N > row_target:
            continue
        if _working_set_bytes(cand, N, Hp) > vmem_budget:
            continue
        best = cand
    if best is None:
        # bt=1 keeps blocks legal when N is sublane-aligned; otherwise fall back
        # to the full batch (block dim == array dim is always legal).
        best = 1 if N % 8 == 0 else B
    return best


def parse_graph_forward(node, graph, params):
    """node: (B, N, H) float; graph: (B, N, N) adjacency (any numeric dtype).
    Returns (B, N, H) float32, same semantics as the PyTorch module."""
    B, N, H = node.shape
    Hp = _round_up(H, 128)                 # lane-dense activations / stores
    bt = _pick_batch_tile(B, N, Hp)
    nb = B // bt

    def pad2(w):
        return jnp.pad(w, ((0, Hp - w.shape[0]), (0, Hp - w.shape[1])))

    # PyTorch Linear: y = x @ W.T + b.  Pre-transpose to (in, out), zero-pad to
    # (Hp, Hp), pre-cast MXU operands to bf16 (accumulation stays f32 on-MXU).
    w1_t = pad2(params["w1"].T).astype(jnp.bfloat16)
    w2_t = pad2(params["w2"].T).astype(jnp.bfloat16)
    wo_t = params["wo"].T                                    # (2H, H)
    wo1_t = pad2(wo_t[:H, :]).astype(jnp.bfloat16)           # acts on node
    wo2_t = pad2(wo_t[H:, :]).astype(jnp.bfloat16)           # acts on node_info
    b1 = jnp.pad(params["b1"], (0, Hp - H)).reshape(1, Hp).astype(jnp.float32)
    b2 = jnp.pad(params["b2"], (0, Hp - H)).reshape(1, Hp).astype(jnp.float32)
    bo = jnp.pad(params["bo"], (0, Hp - H)).reshape(1, Hp).astype(jnp.float32)

    # Halve the dominant HBM stream (exact for 0/1 adjacencies); degrees are
    # re-accumulated in f32 on the MXU inside the kernel.
    graph_bf = graph.astype(jnp.bfloat16)
    # Fold batch into rows, zero-pad features (padded cols stay 0 end-to-end).
    node2d = jnp.pad(node.astype(jnp.float32),
                     ((0, 0), (0, 0), (0, Hp - H))).reshape(B * N, Hp)

    kernel = functools.partial(parse_graph_kernel, bt=bt, n=N, hp=Hp)
    const2d = lambda shape: pl.BlockSpec(shape, lambda i: (0, 0))

    vmem_limit = int(min(max(2 * _working_set_bytes(bt, N, Hp), 32 << 20),
                         64 << 20))

    out2d = pl.pallas_call(
        kernel,
        out_shape=jax.ShapeDtypeStruct((B * N, Hp), jnp.float32),
        grid_spec=pltpu.PrefetchScalarGridSpec(
            num_scalar_prefetch=0,
            grid=(nb,),
            in_specs=[
                pl.BlockSpec((bt * N, Hp), lambda i: (i, 0)),    # node rows (f32)
                pl.BlockSpec((bt, N, N), lambda i: (i, 0, 0)),   # graph (bf16)
                const2d((Hp, Hp)),                               # W1^T
                const2d((1, Hp)),                                # b1
                const2d((Hp, Hp)),                               # W2^T
                const2d((1, Hp)),                                # b2
                const2d((Hp, Hp)),                               # Wo^T[:H]
                const2d((Hp, Hp)),                               # Wo^T[H:]
                const2d((1, Hp)),                                # bo
            ],
            out_specs=pl.BlockSpec((bt * N, Hp), lambda i: (i, 0)),
        ),
        compiler_params=pltpu.CompilerParams(
            dimension_semantics=("parallel",),
            vmem_limit_bytes=vmem_limit),
    )(node2d, graph_bf, w1_t, b1, w2_t, b2, wo1_t, wo2_t, bo)

    return out2d.reshape(B, N, Hp)[:, :, :H]


def reference_forward(node, graph, params):
    """Plain-JAX f32 reference matching the PyTorch module."""
    graph = graph.astype(jnp.float32)
    d = jnp.sum(graph, axis=2)                               # per-batch row sums
    dinv = d ** -0.5
    g_norm = graph * dinv[:, :, None] * dinv[:, None, :]
    h1 = jax.nn.relu(jnp.matmul(g_norm, node) @ params["w1"].T + params["b1"])
    h2 = jax.nn.relu(jnp.matmul(g_norm, h1) @ params["w2"].T + params["b2"])
    agg = jnp.concatenate([node, h2], axis=2)
    return jax.nn.relu(agg @ params["wo"].T + params["bo"])


def init_params(key, hidden):
    """Deterministic init mimicking nn.Linear default (uniform +-1/sqrt(fan_in))."""
    ks = jax.random.split(key, 6)
    lim_h = 1.0 / jnp.sqrt(hidden)
    lim_2h = 1.0 / jnp.sqrt(2 * hidden)
    return {
        "w1": jax.random.uniform(ks[0], (hidden, hidden), jnp.float32, -lim_h, lim_h),
        "b1": jax.random.uniform(ks[1], (hidden,), jnp.float32, -lim_h, lim_h),
        "w2": jax.random.uniform(ks[2], (hidden, hidden), jnp.float32, -lim_h, lim_h),
        "b2": jax.random.uniform(ks[3], (hidden,), jnp.float32, -lim_h, lim_h),
        "wo": jax.random.uniform(ks[4], (hidden, 2 * hidden), jnp.float32, -lim_2h, lim_2h),
        "bo": jax.random.uniform(ks[5], (hidden,), jnp.float32, -lim_2h, lim_2h),
    }


if __name__ == "__main__":
    B, N, H = 2, 8, 32  # batch, num_nodes (seq), hidden_size

    key = jax.random.PRNGKey(0)
    k_node, k_graph, k_param = jax.random.split(key, 3)

    node = jax.random.normal(k_node, (B, N, H), dtype=jnp.float32)
    # 0/1 adjacency with self-loops so every node has degree >= 1 (matches
    # typical parse-graph inputs and avoids 0^-0.5).  Passed as f32; the
    # wrapper streams it to the kernel as bf16 (exact for 0/1 entries).
    adj = (jax.random.uniform(k_graph, (B, N, N)) > 0.5).astype(jnp.float32)
    eye = jnp.eye(N, dtype=jnp.float32)[None]
    graph = jnp.clip(adj + eye, 0.0, 1.0)

    params = init_params(k_param, H)

    out = parse_graph_forward(node, graph, params)
    out = jax.block_until_ready(out)

    ref = reference_forward(node, graph, params)
    assert out.shape == (B, N, H)
    # bf16 MXU operands with f32 accumulation -> compare to the f32 reference
    # with a tolerance covering bf16 operand rounding across the 5 matmuls.
    assert jnp.allclose(out, ref, atol=3e-2, rtol=3e-2), "mismatch vs reference"

    print("KERNEL_OK")
</pallas_src>

<mosaic_0001>
module attributes {stable_mosaic.version = 11 : i64} {
  func.func @parse_graph_kernel(%arg0: i32, %arg1: memref<8x128xf32, #tpu.memory_space<vmem>>, %arg2: memref<1x8x8xbf16, #tpu.memory_space<vmem>>, %arg3: memref<128x128xbf16, #tpu.memory_space<vmem>>, %arg4: memref<1x128xf32, #tpu.memory_space<vmem>>, %arg5: memref<128x128xbf16, #tpu.memory_space<vmem>>, %arg6: memref<1x128xf32, #tpu.memory_space<vmem>>, %arg7: memref<128x128xbf16, #tpu.memory_space<vmem>>, %arg8: memref<128x128xbf16, #tpu.memory_space<vmem>>, %arg9: memref<1x128xf32, #tpu.memory_space<vmem>>, %arg10: memref<8x128xf32, #tpu.memory_space<vmem>>) attributes {dimension_semantics = [#tpu.dimension_semantics<parallel>], iteration_bounds = array<i64: 2>, scalar_prefetch = 0 : i64, scratch_operands = 0 : i64, tpu.core_type = #tpu.core_type<tc>, window_params = [{transform_indices = @transform_0, window_bounds = array<i64: 8, 128>}, {transform_indices = @transform_1, window_bounds = array<i64: 1, 8, 8>}, {pipeline_mode = #tpu.pipeline_mode<synchronous>, transform_indices = @transform_2, window_bounds = array<i64: 128, 128>}, {pipeline_mode = #tpu.pipeline_mode<synchronous>, transform_indices = @transform_3, window_bounds = array<i64: 1, 128>}, {pipeline_mode = #tpu.pipeline_mode<synchronous>, transform_indices = @transform_4, window_bounds = array<i64: 128, 128>}, {pipeline_mode = #tpu.pipeline_mode<synchronous>, transform_indices = @transform_5, window_bounds = array<i64: 1, 128>}, {pipeline_mode = #tpu.pipeline_mode<synchronous>, transform_indices = @transform_6, window_bounds = array<i64: 128, 128>}, {pipeline_mode = #tpu.pipeline_mode<synchronous>, transform_indices = @transform_7, window_bounds = array<i64: 128, 128>}, {pipeline_mode = #tpu.pipeline_mode<synchronous>, transform_indices = @transform_8, window_bounds = array<i64: 1, 128>}, {transform_indices = @transform_9, window_bounds = array<i64: 8, 128>}]} {
    %c0 = arith.constant 0 : index
    %c0_0 = arith.constant 0 : index
    %c0_1 = arith.constant 0 : index
    %0 = vector.load %arg2[%c0, %c0_0, %c0_1] : memref<1x8x8xbf16, #tpu.memory_space<vmem>>, vector<1x8x8xbf16>
    %cst = arith.constant 1.000000e+00 : bf16
    %1 = vector.broadcast %cst : bf16 to vector<1x8x1xbf16>
    "tpu.trace_start"() <{level = 10 : i32, message = "bnm,bmk->bnk"}> : () -> ()
    %cst_2 = arith.constant dense<0.000000e+00> : vector<1x8x1xf32>
    %2 = tpu.matmul %0, %1, %cst_2 {dimension_numbers = #tpu.dot_dimension_numbers<[2], [1], [1], [2], [0, 0, 0, 1, 1, 2], [0], [0]>} : vector<1x8x8xbf16>, vector<1x8x1xbf16>, vector<1x8x1xf32> -> vector<1x8x1xf32>
    "tpu.trace_stop"() : () -> ()
    %3 = math.rsqrt %2 : vector<1x8x1xf32>
    %c0_3 = arith.constant 0 : index
    %c0_4 = arith.constant 0 : index
    %4 = vector.load %arg1[%c0_3, %c0_4] : memref<8x128xf32, #tpu.memory_space<vmem>>, vector<8x128xf32>
    %5 = vector.shape_cast %4 : vector<8x128xf32> to vector<1x8x128xf32>
    %6 = vector.broadcast %3 : vector<1x8x1xf32> to vector<1x8x128xf32>
    %7 = arith.mulf %6, %5 : vector<1x8x128xf32>
    %8 = arith.truncf %7 : vector<1x8x128xf32> to vector<1x8x128xbf16>
    "tpu.trace_start"() <{level = 10 : i32, message = "bnm,bmh->bnh"}> : () -> ()
    %cst_5 = arith.constant dense<0.000000e+00> : vector<1x8x128xf32>
    %9 = tpu.matmul %0, %8, %cst_5 {dimension_numbers = #tpu.dot_dimension_numbers<[2], [1], [1], [2], [0, 0, 0, 1, 1, 2], [0], [0]>} : vector<1x8x8xbf16>, vector<1x8x128xbf16>, vector<1x8x128xf32> -> vector<1x8x128xf32>
    "tpu.trace_stop"() : () -> ()
    %10 = vector.broadcast %3 : vector<1x8x1xf32> to vector<1x8x128xf32>
    %11 = arith.mulf %10, %9 : vector<1x8x128xf32>
    %12 = vector.shape_cast %11 : vector<1x8x128xf32> to vector<8x128xf32>
    %13 = arith.truncf %12 : vector<8x128xf32> to vector<8x128xbf16>
    %c0_6 = arith.constant 0 : index
    %c0_7 = arith.constant 0 : index
    %14 = vector.load %arg3[%c0_6, %c0_7] : memref<128x128xbf16, #tpu.memory_space<vmem>>, vector<128x128xbf16>
    %cst_8 = arith.constant dense<0.000000e+00> : vector<8x128xf32>
    %15 = tpu.matmul %13, %14, %cst_8 {dimension_numbers = #tpu.dot_dimension_numbers<[1], [0], [0], [1], [0, 0, 1, 1], [], []>} : vector<8x128xbf16>, vector<128x128xbf16>, vector<8x128xf32> -> vector<8x128xf32>
    %c0_9 = arith.constant 0 : index
    %c0_10 = arith.constant 0 : index
    %16 = vector.load %arg4[%c0_9, %c0_10] : memref<1x128xf32, #tpu.memory_space<vmem>>, vector<1x128xf32>
    %17 = vector.broadcast %16 : vector<1x128xf32> to vector<8x128xf32>
    %18 = arith.addf %15, %17 : vector<8x128xf32>
    %cst_11 = arith.constant 0.000000e+00 : f32
    %19 = vector.broadcast %cst_11 : f32 to vector<8x128xf32>
    %20 = arith.maximumf %18, %19 : vector<8x128xf32>
    %21 = vector.shape_cast %20 : vector<8x128xf32> to vector<1x8x128xf32>
    %22 = vector.broadcast %3 : vector<1x8x1xf32> to vector<1x8x128xf32>
    %23 = arith.mulf %22, %21 : vector<1x8x128xf32>
    %24 = arith.truncf %23 : vector<1x8x128xf32> to vector<1x8x128xbf16>
    "tpu.trace_start"() <{level = 10 : i32, message = "bnm,bmh->bnh"}> : () -> ()
    %cst_12 = arith.constant dense<0.000000e+00> : vector<1x8x128xf32>
    %25 = tpu.matmul %0, %24, %cst_12 {dimension_numbers = #tpu.dot_dimension_numbers<[2], [1], [1], [2], [0, 0, 0, 1, 1, 2], [0], [0]>} : vector<1x8x8xbf16>, vector<1x8x128xbf16>, vector<1x8x128xf32> -> vector<1x8x128xf32>
    "tpu.trace_stop"() : () -> ()
    %26 = vector.broadcast %3 : vector<1x8x1xf32> to vector<1x8x128xf32>
    %27 = arith.mulf %26, %25 : vector<1x8x128xf32>
    %28 = vector.shape_cast %27 : vector<1x8x128xf32> to vector<8x128xf32>
    %29 = arith.truncf %28 : vector<8x128xf32> to vector<8x128xbf16>
    %c0_13 = arith.constant 0 : index
    %c0_14 = arith.constant 0 : index
    %30 = vector.load %arg5[%c0_13, %c0_14] : memref<128x128xbf16, #tpu.memory_space<vmem>>, vector<128x128xbf16>
    %cst_15 = arith.constant dense<0.000000e+00> : vector<8x128xf32>
    %31 = tpu.matmul %29, %30, %cst_15 {dimension_numbers = #tpu.dot_dimension_numbers<[1], [0], [0], [1], [0, 0, 1, 1], [], []>} : vector<8x128xbf16>, vector<128x128xbf16>, vector<8x128xf32> -> vector<8x128xf32>
    %c0_16 = arith.constant 0 : index
    %c0_17 = arith.constant 0 : index
    %32 = vector.load %arg6[%c0_16, %c0_17] : memref<1x128xf32, #tpu.memory_space<vmem>>, vector<1x128xf32>
    %33 = vector.broadcast %32 : vector<1x128xf32> to vector<8x128xf32>
    %34 = arith.addf %31, %33 : vector<8x128xf32>
    %cst_18 = arith.constant 0.000000e+00 : f32
    %35 = vector.broadcast %cst_18 : f32 to vector<8x128xf32>
    %36 = arith.maximumf %34, %35 : vector<8x128xf32>
    %37 = arith.truncf %4 : vector<8x128xf32> to vector<8x128xbf16>
    %c0_19 = arith.constant 0 : index
    %c0_20 = arith.constant 0 : index
    %38 = vector.load %arg7[%c0_19, %c0_20] : memref<128x128xbf16, #tpu.memory_space<vmem>>, vector<128x128xbf16>
    %cst_21 = arith.constant dense<0.000000e+00> : vector<8x128xf32>
    %39 = tpu.matmul %37, %38, %cst_21 {dimension_numbers = #tpu.dot_dimension_numbers<[1], [0], [0], [1], [0, 0, 1, 1], [], []>} : vector<8x128xbf16>, vector<128x128xbf16>, vector<8x128xf32> -> vector<8x128xf32>
    %40 = arith.truncf %36 : vector<8x128xf32> to vector<8x128xbf16>
    %c0_22 = arith.constant 0 : index
    %c0_23 = arith.constant 0 : index
    %41 = vector.load %arg8[%c0_22, %c0_23] : memref<128x128xbf16, #tpu.memory_space<vmem>>, vector<128x128xbf16>
    %cst_24 = arith.constant dense<0.000000e+00> : vector<8x128xf32>
    %42 = tpu.matmul %40, %41, %cst_24 {dimension_numbers = #tpu.dot_dimension_numbers<[1], [0], [0], [1], [0, 0, 1, 1], [], []>} : vector<8x128xbf16>, vector<128x128xbf16>, vector<8x128xf32> -> vector<8x128xf32>
    %43 = arith.addf %39, %42 : vector<8x128xf32>
    %c0_25 = arith.constant 0 : index
    %c0_26 = arith.constant 0 : index
    %44 = vector.load %arg9[%c0_25, %c0_26] : memref<1x128xf32, #tpu.memory_space<vmem>>, vector<1x128xf32>
    %45 = vector.broadcast %44 : vector<1x128xf32> to vector<8x128xf32>
    %46 = arith.addf %43, %45 : vector<8x128xf32>
    %cst_27 = arith.constant 0.000000e+00 : f32
    %47 = vector.broadcast %cst_27 : f32 to vector<8x128xf32>
    %48 = arith.maximumf %46, %47 : vector<8x128xf32>
    %c0_28 = arith.constant 0 : index
    %c0_29 = arith.constant 0 : index
    %49 = vector.load %arg10[%c0_28, %c0_29] : memref<8x128xf32, #tpu.memory_space<vmem>>, vector<8x128xf32>
    tpu.vector_store %arg10[%c0_28, %c0_29], %48 {strides = array<i32>} : memref<8x128xf32, #tpu.memory_space<vmem>>, vector<8x128xf32>,
    return
  }
  func.func @transform_0(%arg0: i32) -> (i32, i32) {
    %c0_i32 = arith.constant 0 : i32
    %c0_i32_0 = arith.constant 0 : i32
    return %arg0, %c0_i32 : i32, i32
  }
  func.func @transform_1(%arg0: i32) -> (i32, i32, i32) {
    %c0_i32 = arith.constant 0 : i32
    %c0_i32_0 = arith.constant 0 : i32
    %c0_i32_1 = arith.constant 0 : i32
    return %arg0, %c0_i32, %c0_i32_0 : i32, i32, i32
  }
  func.func @transform_2(%arg0: i32) -> (i32, i32) {
    %c0_i32 = arith.constant 0 : i32
    %c0_i32_0 = arith.constant 0 : i32
    %c0_i32_1 = arith.constant 0 : i32
    return %c0_i32, %c0_i32_0 : i32, i32
  }
  func.func @transform_3(%arg0: i32) -> (i32, i32) {
    %c0_i32 = arith.constant 0 : i32
    %c0_i32_0 = arith.constant 0 : i32
    %c0_i32_1 = arith.constant 0 : i32
    return %c0_i32, %c0_i32_0 : i32, i32
  }
  func.func @transform_4(%arg0: i32) -> (i32, i32) {
    %c0_i32 = arith.constant 0 : i32
    %c0_i32_0 = arith.constant 0 : i32
    %c0_i32_1 = arith.constant 0 : i32
    return %c0_i32, %c0_i32_0 : i32, i32
  }
  func.func @transform_5(%arg0: i32) -> (i32, i32) {
    %c0_i32 = arith.constant 0 : i32
    %c0_i32_0 = arith.constant 0 : i32
    %c0_i32_1 = arith.constant 0 : i32
    return %c0_i32, %c0_i32_0 : i32, i32
  }
  func.func @transform_6(%arg0: i32) -> (i32, i32) {
    %c0_i32 = arith.constant 0 : i32
    %c0_i32_0 = arith.constant 0 : i32
    %c0_i32_1 = arith.constant 0 : i32
    return %c0_i32, %c0_i32_0 : i32, i32
  }
  func.func @transform_7(%arg0: i32) -> (i32, i32) {
    %c0_i32 = arith.constant 0 : i32
    %c0_i32_0 = arith.constant 0 : i32
    %c0_i32_1 = arith.constant 0 : i32
    return %c0_i32, %c0_i32_0 : i32, i32
  }
  func.func @transform_8(%arg0: i32) -> (i32, i32) {
    %c0_i32 = arith.constant 0 : i32
    %c0_i32_0 = arith.constant 0 : i32
    %c0_i32_1 = arith.constant 0 : i32
    return %c0_i32, %c0_i32_0 : i32, i32
  }
  func.func @transform_9(%arg0: i32) -> (i32, i32) {
    %c0_i32 = arith.constant 0 : i32
    %c0_i32_0 = arith.constant 0 : i32
    return %arg0, %c0_i32 : i32, i32
  }
}

</mosaic_0001>

<llo_original>
// kernel: tpu_custom_call.1
$region0: #{tpu_custom_call.1}
  #allocation0 [shape = 'u32[]', space=smem, size = 0x4, offset = 0x4, fixed_abs, tag = 'smem constant byte address 0x4 - core index']
  #allocation1 [shape = 'u32[144,128]{1,0:T(1,128)}', space=vmem, size = 0x12000, scoped, tag = 'internal scratch']
  %s0 = inlined_call_operand.hbm [shape: f32[16,128], index: 0, kind: input, shape index: {}]
  %s1 = inlined_call_operand.hbm [shape: bf16[2,8,8], index: 1, kind: input, shape index: {}]
  %s2 = inlined_call_operand.hbm [shape: bf16[128,128], index: 2, kind: input, shape index: {}]
  %s3 = inlined_call_operand.vmem [shape: f32[1,128], index: 3, kind: input, shape index: {}]
  %s4 = inlined_call_operand.hbm [shape: bf16[128,128], index: 4, kind: input, shape index: {}]
  %s5 = inlined_call_operand.vmem [shape: f32[1,128], index: 5, kind: input, shape index: {}]
  %s6 = inlined_call_operand.hbm [shape: bf16[128,128], index: 6, kind: input, shape index: {}]
  %s7 = inlined_call_operand.hbm [shape: bf16[128,128], index: 7, kind: input, shape index: {}]
  %s8 = inlined_call_operand.vmem [shape: f32[1,128], index: 8, kind: input, shape index: {}]
  %s9 = inlined_call_operand.hbm [shape: f32[16,128], index: 9, kind: output, shape index: {}]
  %s10 = sld [smem:[#allocation0]]
  $region93: #{tpu_custom_call.1} parent=0
    _
  %s12 = ssub.s32 1, %s10
  %s13 = scalar_select 0, %s12, %s10
  $region1: #{tpu_custom_call.1} parent=0
    #allocation2 [shape = 'u8[8192]{0}', space=vmem, size = 0x2000, scoped, tag = 'input window, operand 0']
    #allocation3 [shape = 's32[2]{0}', space=sflag, size = 0x8, scoped, tag = 'scoped memory for tpu_custom_call.1']
    #allocation4 [shape = 's32[2]{0}', space=sflag, size = 0x8, scoped, tag = 'scoped memory for tpu_custom_call.1']
    #allocation5 [shape = 'u8[4096]{0}', space=vmem, size = 0x1000, scoped, tag = 'input window, operand 1']
    #allocation6 [shape = 's32[2]{0}', space=sflag, size = 0x8, scoped, tag = 'scoped memory for tpu_custom_call.1']
    #allocation7 [shape = 'u8[32768]{0}', space=vmem, size = 0x8000, scoped, tag = 'input window, operand 2, single buffered']
    #allocation8 [shape = 'u8[32768]{0}', space=vmem, size = 0x8000, scoped, tag = 'input window, operand 4, single buffered']
    #allocation9 [shape = 's32[1]{0}', space=sflag, size = 0x4, scoped, tag = 'scoped memory for tpu_custom_call.1']
    #allocation10 [shape = 'u8[32768]{0}', space=vmem, size = 0x8000, scoped, tag = 'input window, operand 6, single buffered']
    #allocation11 [shape = 'u8[32768]{0}', space=vmem, size = 0x8000, scoped, tag = 'input window, operand 7, single buffered']
    #allocation12 [shape = 's32[1]{0}', space=sflag, size = 0x4, scoped, tag = 'scoped memory for tpu_custom_call.1']
    #allocation13 [shape = 'u8[8192]{0}', space=vmem, size = 0x2000, scoped, tag = 'output window, operand 0']
    %14 = vsyncpa [#allocation3], 0
    %s15 = scalar_lea.sflag [#allocation3], 1
    %16 = vsyncpa %s15, 0
    %17 = vsyncpa [#allocation6], 0
    %s18 = scalar_lea.sflag [#allocation6], 1
    %19 = vsyncpa %s18, 0
    %20 = vsyncpa [#allocation9], 0
    %21 = vsyncpa [#allocation12], 0
    %22 = vsyncpa [#allocation4], 0
    %s23 = scalar_lea.sflag [#allocation4], 1
    %24 = vsyncpa %s23, 0
    loop: start=0, step=1, limit=4
    $region2: #{tpu_custom_call.1} parent=1 // loop_pre_header
      _
    $region3: #{tpu_custom_call.1} parent=1 // loop_header
      %s26 = sphi 0, %s30
      %p27 = scmp.ge.s32.totalorder %s26, 4
      %s36 = sphi 0, %s38
      %s39 = sphi 0, %s36
      %s40 = sphi 0, %s39
      %s56 = sphi 0, %s40
      %s62 = sphi 0, %s64
      %s65 = sphi 0, %s62
      %s66 = sphi 0, %s65
      %s82 = sphi 0, %s66
      %s86 = sphi 0, %s86
      %s88 = sphi 0, %s86
      %s89 = sphi 0, %s88
      %s103 = sphi 0, %s89
      %s107 = sphi 0, %s107
      %s109 = sphi 0, %s107
      %s110 = sphi 0, %s109
      %s124 = sphi 0, %s110
      %s128 = sphi 0, %s128
      %s130 = sphi 0, %s128
      %s131 = sphi 0, %s130
      %s145 = sphi 0, %s131
      %s149 = sphi 0, %s149
      %s151 = sphi 0, %s149
      %s152 = sphi 0, %s151
      %s166 = sphi 0, %s152
      %s170 = sphi 0, %s170
      %s172 = sphi 0, %s170
      %s173 = sphi 0, %s172
      %s187 = sphi 0, %s173
      %s191 = sphi 0, %s191
      %s193 = sphi 0, %s191
      %s194 = sphi 0, %s193
      %s208 = sphi 0, %s194
      %s212 = sphi 0, %s212
      %s214 = sphi 0, %s212
      %s215 = sphi 0, %s214
      %s229 = sphi 0, %s215
      %s235 = sphi 0, %s237
      %s238 = sphi 0, %s235
      %s239 = sphi 0, %s238
      %s255 = sphi 0, %s239
    $region4: #{tpu_custom_call.1} parent=1 // loop_header_branch
      %29 = sbr.rel (%p27) target = $region8
    $region5: #{tpu_custom_call.1} parent=1 // loop_body
      %s31 = ssub.s32 %s26, 1
      %s32 = ssub.s32 %s26, 2
      %s33 = sadd.s32 %s26, 1
      %s34 = ssub.s32 %s26, %s33
      %p35 = scmp.eq.s32.totalorder %s34, 0
      %s37 = sadd.s32 %s36, 1
      %s38 = scalar_select %p35, %s36, %s37
      %p41 = pneg %p35
      %p42 = scmp.eq.s32.totalorder %s26, 1
      %p43 = por %p41, %p42
      %p44 = scmp.ne.s32.totalorder %s36, %s39
      %p45 = scmp.eq.s32.totalorder %s26, 0
      %p46 = por %p44, %p45
      %p47 = scmp.ne.s32.totalorder %s36, %s39
      %p48 = scmp.eq.s32.totalorder %s31, 1
      %p49 = por %p47, %p48
      %p50 = scmp.ne.s32.totalorder %s39, %s40
      %p51 = scmp.eq.s32.totalorder %s31, 0
      %p52 = por %p50, %p51
      %p53 = scmp.ne.s32.totalorder %s39, %s40
      %p54 = scmp.eq.s32.totalorder %s32, 1
      %p55 = por %p53, %p54
      %p57 = scmp.ne.s32.totalorder %s40, %s56
      %p58 = scmp.eq.s32.totalorder %s32, 0
      %p59 = por %p57, %p58
      %s60 = ssub.s32 %s26, %s33
      %p61 = scmp.eq.s32.totalorder %s60, 0
      %s63 = sadd.s32 %s62, 1
      %s64 = scalar_select %p61, %s62, %s63
      %p67 = pneg %p61
      %p68 = scmp.eq.s32.totalorder %s26, 1
      %p69 = por %p67, %p68
      %p70 = scmp.ne.s32.totalorder %s62, %s65
      %p71 = scmp.eq.s32.totalorder %s26, 0
      %p72 = por %p70, %p71
      %p73 = scmp.ne.s32.totalorder %s62, %s65
      %p74 = scmp.eq.s32.totalorder %s31, 1
      %p75 = por %p73, %p74
      %p76 = scmp.ne.s32.totalorder %s65, %s66
      %p77 = scmp.eq.s32.totalorder %s31, 0
      %p78 = por %p76, %p77
      %p79 = scmp.ne.s32.totalorder %s65, %s66
      %p80 = scmp.eq.s32.totalorder %s32, 1
      %p81 = por %p79, %p80
      %p83 = scmp.ne.s32.totalorder %s66, %s82
      %p84 = scmp.eq.s32.totalorder %s32, 0
      %p85 = por %p83, %p84
      %s87 = sadd.s32 %s86, 1
      %p90 = scmp.eq.s32.totalorder %s26, 1
      %p91 = scmp.ne.s32.totalorder %s86, %s88
      %p92 = scmp.eq.s32.totalorder %s26, 0
      %p93 = por %p91, %p92
      %p94 = scmp.ne.s32.totalorder %s86, %s88
      %p95 = scmp.eq.s32.totalorder %s31, 1
      %p96 = por %p94, %p95
      %p97 = scmp.ne.s32.totalorder %s88, %s89
      %p98 = scmp.eq.s32.totalorder %s31, 0
      %p99 = por %p97, %p98
      %p100 = scmp.ne.s32.totalorder %s88, %s89
      %p101 = scmp.eq.s32.totalorder %s32, 1
      %p102 = por %p100, %p101
      %p104 = scmp.ne.s32.totalorder %s89, %s103
      %p105 = scmp.eq.s32.totalorder %s32, 0
      %p106 = por %p104, %p105
      %s108 = sadd.s32 %s107, 1
      %p111 = scmp.eq.s32.totalorder %s26, 1
      %p112 = scmp.ne.s32.totalorder %s107, %s109
      %p113 = scmp.eq.s32.totalorder %s26, 0
      %p114 = por %p112, %p113
      %p115 = scmp.ne.s32.totalorder %s107, %s109
      %p116 = scmp.eq.s32.totalorder %s31, 1
      %p117 = por %p115, %p116
      %p118 = scmp.ne.s32.totalorder %s109, %s110
      %p119 = scmp.eq.s32.totalorder %s31, 0
      %p120 = por %p118, %p119
      %p121 = scmp.ne.s32.totalorder %s109, %s110
      %p122 = scmp.eq.s32.totalorder %s32, 1
      %p123 = por %p121, %p122
      %p125 = scmp.ne.s32.totalorder %s110, %s124
      %p126 = scmp.eq.s32.totalorder %s32, 0
      %p127 = por %p125, %p126
      %s129 = sadd.s32 %s128, 1
      %p132 = scmp.eq.s32.totalorder %s26, 1
      %p133 = scmp.ne.s32.totalorder %s128, %s130
      %p134 = scmp.eq.s32.totalorder %s26, 0
      %p135 = por %p133, %p134
      %p136 = scmp.ne.s32.totalorder %s128, %s130
      %p137 = scmp.eq.s32.totalorder %s31, 1
      %p138 = por %p136, %p137
      %p139 = scmp.ne.s32.totalorder %s130, %s131
      %p140 = scmp.eq.s32.totalorder %s31, 0
      %p141 = por %p139, %p140
      %p142 = scmp.ne.s32.totalorder %s130, %s131
      %p143 = scmp.eq.s32.totalorder %s32, 1
      %p144 = por %p142, %p143
      %p146 = scmp.ne.s32.totalorder %s131, %s145
      %p147 = scmp.eq.s32.totalorder %s32, 0
      %p148 = por %p146, %p147
      %s150 = sadd.s32 %s149, 1
      %p153 = scmp.eq.s32.totalorder %s26, 1
      %p154 = scmp.ne.s32.totalorder %s149, %s151
      %p155 = scmp.eq.s32.totalorder %s26, 0
      %p156 = por %p154, %p155
      %p157 = scmp.ne.s32.totalorder %s149, %s151
      %p158 = scmp.eq.s32.totalorder %s31, 1
      %p159 = por %p157, %p158
      %p160 = scmp.ne.s32.totalorder %s151, %s152
      %p161 = scmp.eq.s32.totalorder %s31, 0
      %p162 = por %p160, %p161
      %p163 = scmp.ne.s32.totalorder %s151, %s152
      %p164 = scmp.eq.s32.totalorder %s32, 1
      %p165 = por %p163, %p164
      %p167 = scmp.ne.s32.totalorder %s152, %s166
      %p168 = scmp.eq.s32.totalorder %s32, 0
      %p169 = por %p167, %p168
      %s171 = sadd.s32 %s170, 1
      %p174 = scmp.eq.s32.totalorder %s26, 1
      %p175 = scmp.ne.s32.totalorder %s170, %s172
      %p176 = scmp.eq.s32.totalorder %s26, 0
      %p177 = por %p175, %p176
      %p178 = scmp.ne.s32.totalorder %s170, %s172
      %p179 = scmp.eq.s32.totalorder %s31, 1
      %p180 = por %p178, %p179
      %p181 = scmp.ne.s32.totalorder %s172, %s173
      %p182 = scmp.eq.s32.totalorder %s31, 0
      %p183 = por %p181, %p182
      %p184 = scmp.ne.s32.totalorder %s172, %s173
      %p185 = scmp.eq.s32.totalorder %s32, 1
      %p186 = por %p184, %p185
      %p188 = scmp.ne.s32.totalorder %s173, %s187
      %p189 = scmp.eq.s32.totalorder %s32, 0
      %p190 = por %p188, %p189
      %s192 = sadd.s32 %s191, 1
      %p195 = scmp.eq.s32.totalorder %s26, 1
      %p196 = scmp.ne.s32.totalorder %s191, %s193
      %p197 = scmp.eq.s32.totalorder %s26, 0
      %p198 = por %p196, %p197
      %p199 = scmp.ne.s32.totalorder %s191, %s193
      %p200 = scmp.eq.s32.totalorder %s31, 1
      %p201 = por %p199, %p200
      %p202 = scmp.ne.s32.totalorder %s193, %s194
      %p203 = scmp.eq.s32.totalorder %s31, 0
      %p204 = por %p202, %p203
      %p205 = scmp.ne.s32.totalorder %s193, %s194
      %p206 = scmp.eq.s32.totalorder %s32, 1
      %p207 = por %p205, %p206
      %p209 = scmp.ne.s32.totalorder %s194, %s208
      %p210 = scmp.eq.s32.totalorder %s32, 0
      %p211 = por %p209, %p210
      %s213 = sadd.s32 %s212, 1
      %p216 = scmp.eq.s32.totalorder %s26, 1
      %p217 = scmp.ne.s32.totalorder %s212, %s214
      %p218 = scmp.eq.s32.totalorder %s26, 0
      %p219 = por %p217, %p218
      %p220 = scmp.ne.s32.totalorder %s212, %s214
      %p221 = scmp.eq.s32.totalorder %s31, 1
      %p222 = por %p220, %p221
      %p223 = scmp.ne.s32.totalorder %s214, %s215
      %p224 = scmp.eq.s32.totalorder %s31, 0
      %p225 = por %p223, %p224
      %p226 = scmp.ne.s32.totalorder %s214, %s215
      %p227 = scmp.eq.s32.totalorder %s32, 1
      %p228 = por %p226, %p227
      %p230 = scmp.ne.s32.totalorder %s215, %s229
      %p231 = scmp.eq.s32.totalorder %s32, 0
      %p232 = por %p230, %p231
      %s233 = ssub.s32 %s26, %s33
      %p234 = scmp.eq.s32.totalorder %s233, 0
      %s236 = sadd.s32 %s235, 1
      %s237 = scalar_select %p234, %s235, %s236
      %p240 = pneg %p234
      %p241 = scmp.eq.s32.totalorder %s26, 1
      %p242 = por %p240, %p241
      %p243 = scmp.ne.s32.totalorder %s235, %s238
      %p244 = scmp.eq.s32.totalorder %s26, 0
      %p245 = por %p243, %p244
      %p246 = scmp.ne.s32.totalorder %s235, %s238
      %p247 = scmp.eq.s32.totalorder %s31, 1
      %p248 = por %p246, %p247
      %p249 = scmp.ne.s32.totalorder %s238, %s239
      %p250 = scmp.eq.s32.totalorder %s31, 0
      %p251 = por %p249, %p250
      %p252 = scmp.ne.s32.totalorder %s238, %s239
      %p253 = scmp.eq.s32.totalorder %s32, 1
      %p254 = por %p252, %p253
      %p256 = scmp.ne.s32.totalorder %s239, %s255
      %p257 = scmp.eq.s32.totalorder %s32, 0
      %p258 = por %p256, %p257
      %p259 = scmp.le.s32.totalorder 1, %s26
      %p260 = scmp.lt.s32.totalorder %s26, 3
      %p261 = pnand %p259, %p260
      %p262 = pneg %p261
      // Predicated region
      $region9: #{tpu_custom_call.1} parent=5 // pred_check
        _
      $region10: #{tpu_custom_call.1} parent=5 // pred_check_branch
        %264 = sbr.rel (%p261) target = $region12
      $region11: #{tpu_custom_call.1} parent=5 // pred_region
        %s265 = ssub.s32 %s26, 1
        // Predicated region
        $region13: #{tpu_custom_call.1} parent=11 // pred_check
          %p266 = pneg %p99
        $region14: #{tpu_custom_call.1} parent=11 // pred_check_branch
          %268 = sbr.rel (%p266) target = $region16
        $region15: #{tpu_custom_call.1} parent=11 // pred_region
          %s270 = ssub.s32 1024, 1024
          %271 = vsyncadd [#allocation6], %s270
          %s272 = sshll.u32 [#allocation7], 4
          %s273 = int_to_ptr.vmem [resolvable:$true] %s272
          %278 = dma.hbm_to_vmem [thread:$0]  %s2, 1024, %s273, [#allocation6], 64, 64, 4
        $region16: #{tpu_custom_call.1} parent=11 // pred_fallthru
          _
        // Predicated region
        $region17: #{tpu_custom_call.1} parent=11 // pred_check
          %p279 = pneg %p120
        $region18: #{tpu_custom_call.1} parent=11 // pred_check_branch
          %281 = sbr.rel (%p279) target = $region20
        $region19: #{tpu_custom_call.1} parent=11 // pred_region
          _
        $region20: #{tpu_custom_call.1} parent=11 // pred_fallthru
          _
        // Predicated region
        $region21: #{tpu_custom_call.1} parent=11 // pred_check
          %p282 = pneg %p141
        $region22: #{tpu_custom_call.1} parent=11 // pred_check_branch
          %284 = sbr.rel (%p282) target = $region24
        $region23: #{tpu_custom_call.1} parent=11 // pred_region
          %s286 = ssub.s32 1024, 1024
          %287 = vsyncadd [#allocation9], %s286
          %s288 = sshll.u32 [#allocation8], 4
          %s289 = int_to_ptr.vmem [resolvable:$true] %s288
          %294 = dma.hbm_to_vmem [thread:$0]  %s4, 1024, %s289, [#allocation9], 64, 64, 4
        $region24: #{tpu_custom_call.1} parent=11 // pred_fallthru
          _
        // Predicated region
        $region25: #{tpu_custom_call.1} parent=11 // pred_check
          %p295 = pneg %p162
        $region26: #{tpu_custom_call.1} parent=11 // pred_check_branch
          %297 = sbr.rel (%p295) target = $region28
        $region27: #{tpu_custom_call.1} parent=11 // pred_region
          _
        $region28: #{tpu_custom_call.1} parent=11 // pred_fallthru
          _
        // Predicated region
        $region29: #{tpu_custom_call.1} parent=11 // pred_check
          %p298 = pneg %p183
        $region30: #{tpu_custom_call.1} parent=11 // pred_check_branch
          %300 = sbr.rel (%p298) target = $region32
        $region31: #{tpu_custom_call.1} parent=11 // pred_region
          %s302 = ssub.s32 1024, 1024
          %303 = vsyncadd [#allocation9], %s302
          %s304 = sshll.u32 [#allocation10], 4
          %s305 = int_to_ptr.vmem [resolvable:$true] %s304
          %310 = dma.hbm_to_vmem [thread:$0]  %s6, 1024, %s305, [#allocation9], 64, 64, 4
        $region32: #{tpu_custom_call.1} parent=11 // pred_fallthru
          _
        // Predicated region
        $region33: #{tpu_custom_call.1} parent=11 // pred_check
          %p311 = pneg %p204
        $region34: #{tpu_custom_call.1} parent=11 // pred_check_branch
          %313 = sbr.rel (%p311) target = $region36
        $region35: #{tpu_custom_call.1} parent=11 // pred_region
          %s315 = ssub.s32 1024, 1024
          %316 = vsyncadd [#allocation12], %s315
          %s317 = sshll.u32 [#allocation11], 4
          %s318 = int_to_ptr.vmem [resolvable:$true] %s317
          %323 = dma.hbm_to_vmem [thread:$0]  %s7, 1024, %s318, [#allocation12], 64, 64, 4
        $region36: #{tpu_custom_call.1} parent=11 // pred_fallthru
          _
        // Predicated region
        $region37: #{tpu_custom_call.1} parent=11 // pred_check
          %p324 = pneg %p225
        $region38: #{tpu_custom_call.1} parent=11 // pred_check_branch
          %326 = sbr.rel (%p324) target = $region40
        $region39: #{tpu_custom_call.1} parent=11 // pred_region
          _
        $region40: #{tpu_custom_call.1} parent=11 // pred_fallthru
          _
      $region12: #{tpu_custom_call.1} parent=5 // pred_fallthru
        _
      %p327 = scmp.lt.s32.totalorder %s26, 2
      // Predicated region
      $region41: #{tpu_custom_call.1} parent=5 // pred_check
        %p328 = pneg %p327
      $region42: #{tpu_custom_call.1} parent=5 // pred_check_branch
        %330 = sbr.rel (%p328) target = $region44
      $region43: #{tpu_custom_call.1} parent=5 // pred_region
        // Predicated region
        $region45: #{tpu_custom_call.1} parent=43 // pred_check
          %p331 = pneg %p46
        $region46: #{tpu_custom_call.1} parent=43 // pred_check_branch
          %333 = sbr.rel (%p331) target = $region48
        $region47: #{tpu_custom_call.1} parent=43 // pred_region
          %s334 = sand.u32 %s36, 1
          %s335 = scalar_lea.sflag [#allocation3], %s334
          %s336 = sand.u32 %s36, 1
          %s337 = smul.addr %s336, 8
          %s338 = scalar_lea.vmem [#allocation2], %s337
          %s340 = ssub.s32 128, 128
          %341 = vsyncadd %s335, %s340
          %s342 = smul.addr %s26, 128
          %s343 = scalar_lea.hbm %s0, %s342
          %s345 = sshll.u32 %s338, 4
          %s346 = int_to_ptr.vmem [resolvable:$true] %s345
          %348 = dma.hbm_to_vmem [thread:$0]  %s343, 128, %s346, %s335
        $region48: #{tpu_custom_call.1} parent=43 // pred_fallthru
          _
        // Predicated region
        $region49: #{tpu_custom_call.1} parent=43 // pred_check
          %p349 = pneg %p72
        $region50: #{tpu_custom_call.1} parent=43 // pred_check_branch
          %351 = sbr.rel (%p349) target = $region52
        $region51: #{tpu_custom_call.1} parent=43 // pred_region
          %s352 = sand.u32 %s26, 1
          %s353 = scalar_lea.sflag [#allocation6], %s352
          %s354 = sand.u32 %s62, 1
          %s355 = smul.addr %s354, 4
          %s356 = scalar_lea.vmem [#allocation5], %s355
          %s358 = ssub.s32 64, 64
          %359 = vsyncadd %s353, %s358
          %s360 = smul.addr %s26, 64
          %s361 = scalar_lea.hbm %s1, %s360
          %s363 = sshll.u32 %s356, 4
          %s364 = int_to_ptr.vmem [resolvable:$true] %s363
          %366 = dma.hbm_to_vmem [thread:$0]  %s361, 64, %s364, %s353
        $region52: #{tpu_custom_call.1} parent=43 // pred_fallthru
          _
      $region44: #{tpu_custom_call.1} parent=5 // pred_fallthru
        _
      %p367 = scmp.le.s32.totalorder 1, %s26
      %p368 = scmp.lt.s32.totalorder %s26, 3
      %p369 = pnand %p367, %p368
      %p370 = pneg %p369
      // Predicated region
      $region53: #{tpu_custom_call.1} parent=5 // pred_check
        _
      $region54: #{tpu_custom_call.1} parent=5 // pred_check_branch
        %372 = sbr.rel (%p369) target = $region56
      $region55: #{tpu_custom_call.1} parent=5 // pred_region
        %s373 = ssub.s32 %s26, 1
        %s374 = sand.u32 %s39, 1
        %s375 = scalar_lea.sflag [#allocation3], %s374
        %s376 = sand.u32 %s39, 1
        %s377 = smul.addr %s376, 8
        %s378 = scalar_lea.vmem [#allocation2], %s377
        // Predicated region
        $region57: #{tpu_custom_call.1} parent=55 // pred_check
          %p379 = pneg %p52
        $region58: #{tpu_custom_call.1} parent=55 // pred_check_branch
          %381 = sbr.rel (%p379) target = $region60
        $region59: #{tpu_custom_call.1} parent=55 // pred_region
          %382 = dma.done %s375, 128
        $region60: #{tpu_custom_call.1} parent=55 // pred_fallthru
          _
        %s383 = sand.u32 %s31, 1
        %s384 = scalar_lea.sflag [#allocation6], %s383
        %s385 = sand.u32 %s65, 1
        %s386 = smul.addr %s385, 4
        %s387 = scalar_lea.vmem [#allocation5], %s386
        // Predicated region
        $region61: #{tpu_custom_call.1} parent=55 // pred_check
          %p388 = pneg %p78
        $region62: #{tpu_custom_call.1} parent=55 // pred_check_branch
          %390 = sbr.rel (%p388) target = $region64
        $region63: #{tpu_custom_call.1} parent=55 // pred_region
          %391 = dma.done %s384, 64
        $region64: #{tpu_custom_call.1} parent=55 // pred_fallthru
          _
        // Predicated region
        $region65: #{tpu_custom_call.1} parent=55 // pred_check
          %p392 = pneg %p99
        $region66: #{tpu_custom_call.1} parent=55 // pred_check_branch
          %394 = sbr.rel (%p392) target = $region68
        $region67: #{tpu_custom_call.1} parent=55 // pred_region
          %395 = dma.done [#allocation6], 1024
        $region68: #{tpu_custom_call.1} parent=55 // pred_fallthru
          _
        // Predicated region
        $region69: #{tpu_custom_call.1} parent=55 // pred_check
          %p396 = pneg %p141
        $region70: #{tpu_custom_call.1} parent=55 // pred_check_branch
          %398 = sbr.rel (%p396) target = $region72
        $region71: #{tpu_custom_call.1} parent=55 // pred_region
          %399 = dma.done [#allocation9], 1024
        $region72: #{tpu_custom_call.1} parent=55 // pred_fallthru
          _
        // Predicated region
        $region73: #{tpu_custom_call.1} parent=55 // pred_check
          %p400 = pneg %p183
        $region74: #{tpu_custom_call.1} parent=55 // pred_check_branch
          %402 = sbr.rel (%p400) target = $region76
        $region75: #{tpu_custom_call.1} parent=55 // pred_region
          %403 = dma.done [#allocation9], 1024
        $region76: #{tpu_custom_call.1} parent=55 // pred_fallthru
          _
        // Predicated region
        $region77: #{tpu_custom_call.1} parent=55 // pred_check
          %p404 = pneg %p204
        $region78: #{tpu_custom_call.1} parent=55 // pred_check_branch
          %406 = sbr.rel (%p404) target = $region80
        $region79: #{tpu_custom_call.1} parent=55 // pred_region
          %407 = dma.done [#allocation12], 1024
        $region80: #{tpu_custom_call.1} parent=55 // pred_fallthru
          _
        %s408 = sand.u32 %s39, 1
        %s409 = scalar_lea.sflag [#allocation3], %s408
        %s410 = sand.u32 %s39, 1
        %s411 = smul.addr %s410, 8
        %s412 = scalar_lea.vmem [#allocation2], %s411
        %p413 = pneg %p52
        %p414 = pneg %p49
        %s415 = sand.u32 %s31, 1
        %s416 = scalar_lea.sflag [#allocation6], %s415
        %s417 = sand.u32 %s65, 1
        %s418 = smul.addr %s417, 4
        %s419 = scalar_lea.vmem [#allocation5], %s418
        %p420 = pneg %p78
        %p421 = pneg %p75
        %p422 = pneg %p99
        %p423 = pneg %p96
        %p424 = pneg %p120
        %p425 = pneg %p117
        %p426 = pneg %p141
        %p427 = pneg %p138
        %p428 = pneg %p162
        %p429 = pneg %p159
        %p430 = pneg %p183
        %p431 = pneg %p180
        %p432 = pneg %p204
        %p433 = pneg %p201
        %p434 = pneg %p225
        %p435 = pneg %p222
        %p436 = pneg %p251
        %p437 = pneg %p248
        %s438 = sand.u32 %s238, 1
        %s439 = scalar_lea.sflag [#allocation4], %s438
        %s440 = sand.u32 %s238, 1
        %s441 = smul.addr %s440, 8
        %s442 = scalar_lea.vmem [#allocation13], %s441
        %v445 = vld [vmem:[%s387] sm:$0xf]
        %vm446 = vcmask 64512
        %v448 = vsel %vm446, %v445, 0
        %vm450 = vcmask 1043456
        %v452 = vsel %vm450, 1065369472, 0
        %454 = vmatprep.subr.bf16.mxu0 0
        %455 = vmatpush1.bf16.msra.mxu0 %v452
        %456 = vmatprep.subr.bf16.mxu0 0
        %457 = vmatpush1.bf16.msra.mxu0 0
        %458 = vmatprep.subr.bf16.mxu0 0
        %459 = vmatpush1.bf16.msra.mxu0 0
        %460 = vmatprep.subr.bf16.mxu0 0
        %461 = vmatpush1.bf16.msra.mxu0 0
        %462 = vmatprep.subr.bf16.mxu0 0
        %463 = vmatpush1.bf16.msra.mxu0 0
        %464 = vmatprep.subr.bf16.mxu0 0
        %465 = vmatpush1.bf16.msra.mxu0 0
        %466 = vmatprep.subr.bf16.mxu0 0
        %467 = vmatpush1.bf16.msra.mxu0 0
        %468 = vmatprep.subr.bf16.mxu0 0
        %469 = vmatpush1.bf16.msra.mxu0 0
        %470 = vmatprep.subr.bf16.mxu0 0
        %471 = vmatpush1.bf16.msra.mxu0 0
        %472 = vmatprep.subr.bf16.mxu0 0
        %473 = vmatpush1.bf16.msra.mxu0 0
        %474 = vmatprep.subr.bf16.mxu0 0
        %475 = vmatpush1.bf16.msra.mxu0 0
        %476 = vmatprep.subr.bf16.mxu0 0
        %477 = vmatpush1.bf16.msra.mxu0 0
        %478 = vmatprep.subr.bf16.mxu0 0
        %479 = vmatpush1.bf16.msra.mxu0 0
        %480 = vmatprep.subr.bf16.mxu0 0
        %481 = vmatpush1.bf16.msra.mxu0 0
        %482 = vmatprep.subr.bf16.mxu0 0
        %483 = vmatpush1.bf16.msra.mxu0 0
        %484 = vmatprep.subr.bf16.mxu0 0
        %485 = vmatpush1.bf16.msra.mxu0 0
        %486 = vmatprep.mubr.bf16.mxu0 0
        %487 = vmatmul.mubr.bf16.gmra.mrb[0].mxu0 %v448
        %v488 = vpop.f32.mrb[0].mxu0
        %v489 = vadd.f32 0.0, %v488
        %v490 = vpop.f32.mrb[0].mxu0
        %v491 = vpop.f32.mrb[0].mxu0
        %v492 = vpop.f32.mrb[0].mxu0
        %493 = vdwg.mxu0
        %v494 = vrsqrt.pop %v489
        %v495 = vld [vmem:[%s378] sm:$0xff]
        %497 = vset.pattern.permute.xlu0 0
        %498 = vperm.xlu0 %497, %v494
        %v499 = vpop.permute.xlu0 %498
        %v501 = vmul.f32 %v499, %v495
        %v502 = vpack.c.bf16 %v501, %v501
        %v504 = vsel %vm450, %v502, 0
        %506 = vmatprep.subr.bf16.mxu0 0
        %507 = vmatpush1.bf16.msra.mxu0 %v504
        %508 = vmatprep.subr.bf16.mxu0 0
        %509 = vmatpush1.bf16.msra.mxu0 0
        %510 = vmatprep.subr.bf16.mxu0 0
        %511 = vmatpush1.bf16.msra.mxu0 0
        %512 = vmatprep.subr.bf16.mxu0 0
        %513 = vmatpush1.bf16.msra.mxu0 0
        %514 = vmatprep.subr.bf16.mxu0 0
        %515 = vmatpush1.bf16.msra.mxu0 0
        %516 = vmatprep.subr.bf16.mxu0 0
        %517 = vmatpush1.bf16.msra.mxu0 0
        %518 = vmatprep.subr.bf16.mxu0 0
        %519 = vmatpush1.bf16.msra.mxu0 0
        %520 = vmatprep.subr.bf16.mxu0 0
        %521 = vmatpush1.bf16.msra.mxu0 0
        %522 = vmatprep.subr.bf16.mxu0 0
        %523 = vmatpush1.bf16.msra.mxu0 0
        %524 = vmatprep.subr.bf16.mxu0 0
        %525 = vmatpush1.bf16.msra.mxu0 0
        %526 = vmatprep.subr.bf16.mxu0 0
        %527 = vmatpush1.bf16.msra.mxu0 0
        %528 = vmatprep.subr.bf16.mxu0 0
        %529 = vmatpush1.bf16.msra.mxu0 0
        %530 = vmatprep.subr.bf16.mxu0 0
        %531 = vmatpush1.bf16.msra.mxu0 0
        %532 = vmatprep.subr.bf16.mxu0 0
        %533 = vmatpush1.bf16.msra.mxu0 0
        %534 = vmatprep.subr.bf16.mxu0 0
        %535 = vmatpush1.bf16.msra.mxu0 0
        %536 = vmatprep.subr.bf16.mxu0 0
        %537 = vmatpush1.bf16.msra.mxu0 0
        %538 = vmatprep.mubr.bf16.mxu0 0
        %539 = vmatmul.mubr.bf16.gmra.mrb[0].mxu0 %v448
        %v540 = vpop.f32.mrb[0].mxu0
        %v541 = vadd.f32 0.0, %v540
        %v542 = vpop.f32.mrb[0].mxu0
        %v543 = vpop.f32.mrb[0].mxu0
        %v544 = vpop.f32.mrb[0].mxu0
        %545 = vdwg.mxu0
        %v546 = vmul.f32 %v499, %v541
        %v547 = vpack.c.bf16 %v546, %v546
        %v548 = vld [vmem:[#allocation7] sm:$0xf]
        %v549 = vld [vmem:[#allocation7 + $0x4] sm:$0xf]
        %v550 = vld [vmem:[#allocation7 + $0x8] sm:$0xf]
        %v551 = vld [vmem:[#allocation7 + $0xc] sm:$0xf]
        %v552 = vld [vmem:[#allocation7 + $0x10] sm:$0xf]
        %v553 = vld [vmem:[#allocation7 + $0x14] sm:$0xf]
        %v554 = vld [vmem:[#allocation7 + $0x18] sm:$0xf]
        %v555 = vld [vmem:[#allocation7 + $0x1c] sm:$0xf]
        %v556 = vld [vmem:[#allocation7 + $0x20] sm:$0xf]
        %v557 = vld [vmem:[#allocation7 + $0x24] sm:$0xf]
        %v558 = vld [vmem:[#allocation7 + $0x28] sm:$0xf]
        %v559 = vld [vmem:[#allocation7 + $0x2c] sm:$0xf]
        %v560 = vld [vmem:[#allocation7 + $0x30] sm:$0xf]
        %v561 = vld [vmem:[#allocation7 + $0x34] sm:$0xf]
        %v562 = vld [vmem:[#allocation7 + $0x38] sm:$0xf]
        %v563 = vld [vmem:[#allocation7 + $0x3c] sm:$0xf]
        %v564 = vld [vmem:[%s3] sm:$0x1]
        %v566 = vlaneseq
        %v567 = vshrl.u32 %v566, 7
        %v568 = vsub.s32 0, %v567
        %v569 = vrot.slane %v564, %v568
        %v587 = vunpack.c.l.b16 %v548
        %v588 = vunpack.c.l.b16 %v549
        %v589 = vunpack.c.l.b16 %v550
        %v590 = vunpack.c.l.b16 %v551
        %v591 = vunpack.c.l.b16 %v552
        %v592 = vunpack.c.l.b16 %v553
        %v593 = vunpack.c.l.b16 %v554
        %v594 = vunpack.c.l.b16 %v555
        %v595 = vunpack.c.l.b16 %v556
        %v596 = vunpack.c.l.b16 %v557
        %v597 = vunpack.c.l.b16 %v558
        %v598 = vunpack.c.l.b16 %v559
        %v599 = vunpack.c.l.b16 %v560
        %v600 = vunpack.c.l.b16 %v561
        %v601 = vunpack.c.l.b16 %v562
        %v602 = vunpack.c.l.b16 %v563
        %v603 = vpack.c.b16 %v588, %v587
        %v604 = vpack.c.b16 %v590, %v589
        %v605 = vpack.c.b16 %v592, %v591
        %v606 = vpack.c.b16 %v594, %v593
        %v607 = vpack.c.b16 %v596, %v595
        %v608 = vpack.c.b16 %v598, %v597
        %v609 = vpack.c.b16 %v600, %v599
        %v610 = vpack.c.b16 %v602, %v601
        %619 = vmatprep.subr.bf16.mxu0 0
        %620 = vmatpush1.bf16.msra.mxu0 %v603
        %621 = vmatprep.subr.bf16.mxu0 0
        %622 = vmatpush1.bf16.msra.mxu0 %v604
        %623 = vmatprep.subr.bf16.mxu0 0
        %624 = vmatpush1.bf16.msra.mxu0 %v605
        %625 = vmatprep.subr.bf16.mxu0 0
        %626 = vmatpush1.bf16.msra.mxu0 %v606
        %627 = vmatprep.subr.bf16.mxu0 0
        %628 = vmatpush1.bf16.msra.mxu0 %v607
        %629 = vmatprep.subr.bf16.mxu0 0
        %630 = vmatpush1.bf16.msra.mxu0 %v608
        %631 = vmatprep.subr.bf16.mxu0 0
        %632 = vmatpush1.bf16.msra.mxu0 %v609
        %633 = vmatprep.subr.bf16.mxu0 0
        %634 = vmatpush1.bf16.msra.mxu0 %v610
        %635 = vmatprep.subr.bf16.mxu0 0
        %636 = vmatpush1.bf16.msra.mxu0 0
        %637 = vmatprep.subr.bf16.mxu0 0
        %638 = vmatpush1.bf16.msra.mxu0 0
        %639 = vmatprep.subr.bf16.mxu0 0
        %640 = vmatpush1.bf16.msra.mxu0 0
        %641 = vmatprep.subr.bf16.mxu0 0
        %642 = vmatpush1.bf16.msra.mxu0 0
        %643 = vmatprep.subr.bf16.mxu0 0
        %644 = vmatpush1.bf16.msra.mxu0 0
        %645 = vmatprep.subr.bf16.mxu0 0
        %646 = vmatpush1.bf16.msra.mxu0 0
        %647 = vmatprep.subr.bf16.mxu0 0
        %648 = vmatpush1.bf16.msra.mxu0 0
        %649 = vmatprep.subr.bf16.mxu0 0
        %650 = vmatpush1.bf16.msra.mxu0 0
        %651 = vmatprep.mubr.bf16.mxu0 0
        %652 = vmatmul.mubr.bf16.gmra.mrb[0].mxu0 %v547
        %v653 = vpop.f32.mrb[0].mxu0
        %v654 = vadd.f32 %v569, %v653
        %v655 = vpop.f32.mrb[0].mxu0
        %v656 = vpop.f32.mrb[0].mxu0
        %v657 = vpop.f32.mrb[0].mxu0
        %658 = vdwg.mxu0
        %v659 = vmax.f32 %v654, 0.0
        %v660 = vmul.f32 %v499, %v659
        %v661 = vpack.c.bf16 %v660, %v660
        %v663 = vsel %vm450, %v661, 0
        %665 = vmatprep.subr.bf16.mxu0 0
        %666 = vmatpush1.bf16.msra.mxu0 %v663
        %667 = vmatprep.subr.bf16.mxu0 0
        %668 = vmatpush1.bf16.msra.mxu0 0
        %669 = vmatprep.subr.bf16.mxu0 0
        %670 = vmatpush1.bf16.msra.mxu0 0
        %671 = vmatprep.subr.bf16.mxu0 0
        %672 = vmatpush1.bf16.msra.mxu0 0
        %673 = vmatprep.subr.bf16.mxu0 0
        %674 = vmatpush1.bf16.msra.mxu0 0
        %675 = vmatprep.subr.bf16.mxu0 0
        %676 = vmatpush1.bf16.msra.mxu0 0
        %677 = vmatprep.subr.bf16.mxu0 0
        %678 = vmatpush1.bf16.msra.mxu0 0
        %679 = vmatprep.subr.bf16.mxu0 0
        %680 = vmatpush1.bf16.msra.mxu0 0
        %681 = vmatprep.subr.bf16.mxu0 0
        %682 = vmatpush1.bf16.msra.mxu0 0
        %683 = vmatprep.subr.bf16.mxu0 0
        %684 = vmatpush1.bf16.msra.mxu0 0
        %685 = vmatprep.subr.bf16.mxu0 0
        %686 = vmatpush1.bf16.msra.mxu0 0
        %687 = vmatprep.subr.bf16.mxu0 0
        %688 = vmatpush1.bf16.msra.mxu0 0
        %689 = vmatprep.subr.bf16.mxu0 0
        %690 = vmatpush1.bf16.msra.mxu0 0
        %691 = vmatprep.subr.bf16.mxu0 0
        %692 = vmatpush1.bf16.msra.mxu0 0
        %693 = vmatprep.subr.bf16.mxu0 0
        %694 = vmatpush1.bf16.msra.mxu0 0
        %695 = vmatprep.subr.bf16.mxu0 0
        %696 = vmatpush1.bf16.msra.mxu0 0
        %697 = vmatprep.mubr.bf16.mxu0 0
        %698 = vmatmul.mubr.bf16.gmra.mrb[0].mxu0 %v448
        %v699 = vpop.f32.mrb[0].mxu0
        %v700 = vadd.f32 0.0, %v699
        %v701 = vpop.f32.mrb[0].mxu0
        %v702 = vpop.f32.mrb[0].mxu0
        %v703 = vpop.f32.mrb[0].mxu0
        %704 = vdwg.mxu0
        %v705 = vmul.f32 %v499, %v700
        %v706 = vpack.c.bf16 %v705, %v705
        %v707 = vld [vmem:[#allocation8] sm:$0xf]
        %v708 = vld [vmem:[#allocation8 + $0x4] sm:$0xf]
        %v709 = vld [vmem:[#allocation8 + $0x8] sm:$0xf]
        %v710 = vld [vmem:[#allocation8 + $0xc] sm:$0xf]
        %v711 = vld [vmem:[#allocation8 + $0x10] sm:$0xf]
        %v712 = vld [vmem:[#allocation8 + $0x14] sm:$0xf]
        %v713 = vld [vmem:[#allocation8 + $0x18] sm:$0xf]
        %v714 = vld [vmem:[#allocation8 + $0x1c] sm:$0xf]
        %v715 = vld [vmem:[#allocation8 + $0x20] sm:$0xf]
        %v716 = vld [vmem:[#allocation8 + $0x24] sm:$0xf]
        %v717 = vld [vmem:[#allocation8 + $0x28] sm:$0xf]
        %v718 = vld [vmem:[#allocation8 + $0x2c] sm:$0xf]
        %v719 = vld [vmem:[#allocation8 + $0x30] sm:$0xf]
        %v720 = vld [vmem:[#allocation8 + $0x34] sm:$0xf]
        %v721 = vld [vmem:[#allocation8 + $0x38] sm:$0xf]
        %v722 = vld [vmem:[#allocation8 + $0x3c] sm:$0xf]
        %v723 = vld [vmem:[%s5] sm:$0x1]
        %v725 = vlaneseq
        %v726 = vshrl.u32 %v725, 7
        %v727 = vsub.s32 0, %v726
        %v728 = vrot.slane %v723, %v727
        %v746 = vunpack.c.l.b16 %v707
        %v747 = vunpack.c.l.b16 %v708
        %v748 = vunpack.c.l.b16 %v709
        %v749 = vunpack.c.l.b16 %v710
        %v750 = vunpack.c.l.b16 %v711
        %v751 = vunpack.c.l.b16 %v712
        %v752 = vunpack.c.l.b16 %v713
        %v753 = vunpack.c.l.b16 %v714
        %v754 = vunpack.c.l.b16 %v715
        %v755 = vunpack.c.l.b16 %v716
        %v756 = vunpack.c.l.b16 %v717
        %v757 = vunpack.c.l.b16 %v718
        %v758 = vunpack.c.l.b16 %v719
        %v759 = vunpack.c.l.b16 %v720
        %v760 = vunpack.c.l.b16 %v721
        %v761 = vunpack.c.l.b16 %v722
        %v762 = vpack.c.b16 %v747, %v746
        %v763 = vpack.c.b16 %v749, %v748
        %v764 = vpack.c.b16 %v751, %v750
        %v765 = vpack.c.b16 %v753, %v752
        %v766 = vpack.c.b16 %v755, %v754
        %v767 = vpack.c.b16 %v757, %v756
        %v768 = vpack.c.b16 %v759, %v758
        %v769 = vpack.c.b16 %v761, %v760
        %778 = vmatprep.subr.bf16.mxu0 0
        %779 = vmatpush1.bf16.msra.mxu0 %v762
        %780 = vmatprep.subr.bf16.mxu0 0
        %781 = vmatpush1.bf16.msra.mxu0 %v763
        %782 = vmatprep.subr.bf16.mxu0 0
        %783 = vmatpush1.bf16.msra.mxu0 %v764
        %784 = vmatprep.subr.bf16.mxu0 0
        %785 = vmatpush1.bf16.msra.mxu0 %v765
        %786 = vmatprep.subr.bf16.mxu0 0
        %787 = vmatpush1.bf16.msra.mxu0 %v766
        %788 = vmatprep.subr.bf16.mxu0 0
        %789 = vmatpush1.bf16.msra.mxu0 %v767
        %790 = vmatprep.subr.bf16.mxu0 0
        %791 = vmatpush1.bf16.msra.mxu0 %v768
        %792 = vmatprep.subr.bf16.mxu0 0
        %793 = vmatpush1.bf16.msra.mxu0 %v769
        %794 = vmatprep.subr.bf16.mxu0 0
        %795 = vmatpush1.bf16.msra.mxu0 0
        %796 = vmatprep.subr.bf16.mxu0 0
        %797 = vmatpush1.bf16.msra.mxu0 0
        %798 = vmatprep.subr.bf16.mxu0 0
        %799 = vmatpush1.bf16.msra.mxu0 0
        %800 = vmatprep.subr.bf16.mxu0 0
        %801 = vmatpush1.bf16.msra.mxu0 0
        %802 = vmatprep.subr.bf16.mxu0 0
        %803 = vmatpush1.bf16.msra.mxu0 0
        %804 = vmatprep.subr.bf16.mxu0 0
        %805 = vmatpush1.bf16.msra.mxu0 0
        %806 = vmatprep.subr.bf16.mxu0 0
        %807 = vmatpush1.bf16.msra.mxu0 0
        %808 = vmatprep.subr.bf16.mxu0 0
        %809 = vmatpush1.bf16.msra.mxu0 0
        %810 = vmatprep.mubr.bf16.mxu0 0
        %811 = vmatmul.mubr.bf16.gmra.mrb[0].mxu0 %v706
        %v812 = vpop.f32.mrb[0].mxu0
        %v813 = vadd.f32 %v728, %v812
        %v814 = vpop.f32.mrb[0].mxu0
        %v815 = vpop.f32.mrb[0].mxu0
        %v816 = vpop.f32.mrb[0].mxu0
        %817 = vdwg.mxu0
        %v818 = vmax.f32 %v813, 0.0
        %v819 = vpack.c.bf16 %v495, %v495
        %v820 = vld [vmem:[#allocation10] sm:$0xf]
        %v821 = vld [vmem:[#allocation10 + $0x4] sm:$0xf]
        %v822 = vld [vmem:[#allocation10 + $0x8] sm:$0xf]
        %v823 = vld [vmem:[#allocation10 + $0xc] sm:$0xf]
        %v824 = vld [vmem:[#allocation10 + $0x10] sm:$0xf]
        %v825 = vld [vmem:[#allocation10 + $0x14] sm:$0xf]
        %v826 = vld [vmem:[#allocation10 + $0x18] sm:$0xf]
        %v827 = vld [vmem:[#allocation10 + $0x1c] sm:$0xf]
        %v828 = vld [vmem:[#allocation10 + $0x20] sm:$0xf]
        %v829 = vld [vmem:[#allocation10 + $0x24] sm:$0xf]
        %v830 = vld [vmem:[#allocation10 + $0x28] sm:$0xf]
        %v831 = vld [vmem:[#allocation10 + $0x2c] sm:$0xf]
        %v832 = vld [vmem:[#allocation10 + $0x30] sm:$0xf]
        %v833 = vld [vmem:[#allocation10 + $0x34] sm:$0xf]
        %v834 = vld [vmem:[#allocation10 + $0x38] sm:$0xf]
        %v835 = vld [vmem:[#allocation10 + $0x3c] sm:$0xf]
        %v836 = vpack.c.bf16 %v818, %v818
        %v837 = vld [vmem:[#allocation11] sm:$0xf]
        %v838 = vld [vmem:[#allocation11 + $0x4] sm:$0xf]
        %v839 = vld [vmem:[#allocation11 + $0x8] sm:$0xf]
        %v840 = vld [vmem:[#allocation11 + $0xc] sm:$0xf]
        %v841 = vld [vmem:[#allocation11 + $0x10] sm:$0xf]
        %v842 = vld [vmem:[#allocation11 + $0x14] sm:$0xf]
        %v843 = vld [vmem:[#allocation11 + $0x18] sm:$0xf]
        %v844 = vld [vmem:[#allocation11 + $0x1c] sm:$0xf]
        %v845 = vld [vmem:[#allocation11 + $0x20] sm:$0xf]
        %v846 = vld [vmem:[#allocation11 + $0x24] sm:$0xf]
        %v847 = vld [vmem:[#allocation11 + $0x28] sm:$0xf]
        %v848 = vld [vmem:[#allocation11 + $0x2c] sm:$0xf]
        %v849 = vld [vmem:[#allocation11 + $0x30] sm:$0xf]
        %v850 = vld [vmem:[#allocation11 + $0x34] sm:$0xf]
        %v851 = vld [vmem:[#allocation11 + $0x38] sm:$0xf]
        %v852 = vld [vmem:[#allocation11 + $0x3c] sm:$0xf]
        %v869 = vunpack.c.l.b16 %v837
        %v870 = vunpack.c.l.b16 %v838
        %v871 = vunpack.c.l.b16 %v839
        %v872 = vunpack.c.l.b16 %v840
        %v873 = vunpack.c.l.b16 %v841
        %v874 = vunpack.c.l.b16 %v842
        %v875 = vunpack.c.l.b16 %v843
        %v876 = vunpack.c.l.b16 %v844
        %v877 = vunpack.c.l.b16 %v845
        %v878 = vunpack.c.l.b16 %v846
        %v879 = vunpack.c.l.b16 %v847
        %v880 = vunpack.c.l.b16 %v848
        %v881 = vunpack.c.l.b16 %v849
        %v882 = vunpack.c.l.b16 %v850
        %v883 = vunpack.c.l.b16 %v851
        %v884 = vunpack.c.l.b16 %v852
        %v885 = vpack.c.b16 %v870, %v869
        %v886 = vpack.c.b16 %v872, %v871
        %v887 = vpack.c.b16 %v874, %v873
        %v888 = vpack.c.b16 %v876, %v875
        %v889 = vpack.c.b16 %v878, %v877
        %v890 = vpack.c.b16 %v880, %v879
        %v891 = vpack.c.b16 %v882, %v881
        %v892 = vpack.c.b16 %v884, %v883
        %901 = vmatprep.subr.bf16.mxu0 0
        %902 = vmatpush1.bf16.msra.mxu0 %v885
        %903 = vmatprep.subr.bf16.mxu0 0
        %904 = vmatpush1.bf16.msra.mxu0 %v886
        %905 = vmatprep.subr.bf16.mxu0 0
        %906 = vmatpush1.bf16.msra.mxu0 %v887
        %907 = vmatprep.subr.bf16.mxu0 0
        %908 = vmatpush1.bf16.msra.mxu0 %v888
        %909 = vmatprep.subr.bf16.mxu0 0
        %910 = vmatpush1.bf16.msra.mxu0 %v889
        %911 = vmatprep.subr.bf16.mxu0 0
        %912 = vmatpush1.bf16.msra.mxu0 %v890
        %913 = vmatprep.subr.bf16.mxu0 0
        %914 = vmatpush1.bf16.msra.mxu0 %v891
        %915 = vmatprep.subr.bf16.mxu0 0
        %916 = vmatpush1.bf16.msra.mxu0 %v892
        %917 = vmatprep.subr.bf16.mxu0 0
        %918 = vmatpush1.bf16.msra.mxu0 0
        %919 = vmatprep.subr.bf16.mxu0 0
        %920 = vmatpush1.bf16.msra.mxu0 0
        %921 = vmatprep.subr.bf16.mxu0 0
        %922 = vmatpush1.bf16.msra.mxu0 0
        %923 = vmatprep.subr.bf16.mxu0 0
        %924 = vmatpush1.bf16.msra.mxu0 0
        %925 = vmatprep.subr.bf16.mxu0 0
        %926 = vmatpush1.bf16.msra.mxu0 0
        %927 = vmatprep.subr.bf16.mxu0 0
        %928 = vmatpush1.bf16.msra.mxu0 0
        %929 = vmatprep.subr.bf16.mxu0 0
        %930 = vmatpush1.bf16.msra.mxu0 0
        %931 = vmatprep.subr.bf16.mxu0 0
        %932 = vmatpush1.bf16.msra.mxu0 0
        %933 = vmatprep.mubr.bf16.mxu0 0
        %934 = vmatmul.mubr.bf16.gmra.mrb[0].mxu0 %v836
        %v935 = vpop.f32.mrb[0].mxu0
        %v936 = vadd.f32 0.0, %v935
        %v937 = vpop.f32.mrb[0].mxu0
        %v938 = vpop.f32.mrb[0].mxu0
        %v939 = vpop.f32.mrb[0].mxu0
        %940 = vdwg.mxu0
        %v957 = vunpack.c.l.b16 %v820
        %v958 = vunpack.c.l.b16 %v821
        %v959 = vunpack.c.l.b16 %v822
        %v960 = vunpack.c.l.b16 %v823
        %v961 = vunpack.c.l.b16 %v824
        %v962 = vunpack.c.l.b16 %v825
        %v963 = vunpack.c.l.b16 %v826
        %v964 = vunpack.c.l.b16 %v827
        %v965 = vunpack.c.l.b16 %v828
        %v966 = vunpack.c.l.b16 %v829
        %v967 = vunpack.c.l.b16 %v830
        %v968 = vunpack.c.l.b16 %v831
        %v969 = vunpack.c.l.b16 %v832
        %v970 = vunpack.c.l.b16 %v833
        %v971 = vunpack.c.l.b16 %v834
        %v972 = vunpack.c.l.b16 %v835
        %v973 = vpack.c.b16 %v958, %v957
        %v974 = vpack.c.b16 %v960, %v959
        %v975 = vpack.c.b16 %v962, %v961
        %v976 = vpack.c.b16 %v964, %v963
        %v977 = vpack.c.b16 %v966, %v965
        %v978 = vpack.c.b16 %v968, %v967
        %v979 = vpack.c.b16 %v970, %v969
        %v980 = vpack.c.b16 %v972, %v971
        %989 = vmatprep.subr.bf16.mxu0 0
        %990 = vmatpush1.bf16.msra.mxu0 %v973
        %991 = vmatprep.subr.bf16.mxu0 0
        %992 = vmatpush1.bf16.msra.mxu0 %v974
        %993 = vmatprep.subr.bf16.mxu0 0
        %994 = vmatpush1.bf16.msra.mxu0 %v975
        %995 = vmatprep.subr.bf16.mxu0 0
        %996 = vmatpush1.bf16.msra.mxu0 %v976
        %997 = vmatprep.subr.bf16.mxu0 0
        %998 = vmatpush1.bf16.msra.mxu0 %v977
        %999 = vmatprep.subr.bf16.mxu0 0
        %1000 = vmatpush1.bf16.msra.mxu0 %v978
        %1001 = vmatprep.subr.bf16.mxu0 0
        %1002 = vmatpush1.bf16.msra.mxu0 %v979
        %1003 = vmatprep.subr.bf16.mxu0 0
        %1004 = vmatpush1.bf16.msra.mxu0 %v980
        %1005 = vmatprep.subr.bf16.mxu0 0
        %1006 = vmatpush1.bf16.msra.mxu0 0
        %1007 = vmatprep.subr.bf16.mxu0 0
        %1008 = vmatpush1.bf16.msra.mxu0 0
        %1009 = vmatprep.subr.bf16.mxu0 0
        %1010 = vmatpush1.bf16.msra.mxu0 0
        %1011 = vmatprep.subr.bf16.mxu0 0
        %1012 = vmatpush1.bf16.msra.mxu0 0
        %1013 = vmatprep.subr.bf16.mxu0 0
        %1014 = vmatpush1.bf16.msra.mxu0 0
        %1015 = vmatprep.subr.bf16.mxu0 0
        %1016 = vmatpush1.bf16.msra.mxu0 0
        %1017 = vmatprep.subr.bf16.mxu0 0
        %1018 = vmatpush1.bf16.msra.mxu0 0
        %1019 = vmatprep.subr.bf16.mxu0 0
        %1020 = vmatpush1.bf16.msra.mxu0 0
        %1021 = vmatprep.mubr.bf16.mxu0 0
        %1022 = vmatmul.mubr.bf16.gmra.mrb[0].mxu0 %v819
        %v1023 = vpop.f32.mrb[0].mxu0
        %v1024 = vadd.f32 %v936, %v1023
        %v1025 = vpop.f32.mrb[0].mxu0
        %v1026 = vpop.f32.mrb[0].mxu0
        %v1027 = vpop.f32.mrb[0].mxu0
        %1028 = vdwg.mxu0
        %v1029 = vld [vmem:[%s8] sm:$0x1]
        %v1031 = vlaneseq
        %v1032 = vshrl.u32 %v1031, 7
        %v1033 = vsub.s32 0, %v1032
        %v1034 = vrot.slane %v1029, %v1033
        %v1036 = vadd.f32 %v1024, %v1034
        %v1037 = vmax.f32 %v1036, 0.0
        %1038 = vst [vmem:[%s442] sm:$0xff] %v1037
        %s1039 = sand.u32 %s238, 1
        %s1040 = scalar_lea.sflag [#allocation4], %s1039
        %s1041 = sand.u32 %s238, 1
        %s1042 = smul.addr %s1041, 8
        %s1043 = scalar_lea.vmem [#allocation13], %s1042
        // Predicated region
        $region81: #{tpu_custom_call.1} parent=55 // pred_check
          %p1044 = pneg %p248
        $region82: #{tpu_custom_call.1} parent=55 // pred_check_branch
          %1046 = sbr.rel (%p1044) target = $region84
        $region83: #{tpu_custom_call.1} parent=55 // pred_region
          %s1048 = ssub.s32 128, 128
          %1049 = vsyncadd %s1040, %s1048
          %s1050 = smul.addr %s31, 128
          %s1051 = scalar_lea.hbm %s9, %s1050
          %s1053 = sshll.u32 %s1043, 4
          %s1054 = int_to_ptr.vmem [resolvable:$true] %s1053
          %1056 = dma.vmem_to_hbm [thread:$0]  %s1054, 128, %s1051, %s1040
        $region84: #{tpu_custom_call.1} parent=55 // pred_fallthru
          _
      $region56: #{tpu_custom_call.1} parent=5 // pred_fallthru
        _
      %p1057 = scmp.le.s32.totalorder 2, %s26
      // Predicated region
      $region85: #{tpu_custom_call.1} parent=5 // pred_check
        %p1058 = pneg %p1057
      $region86: #{tpu_custom_call.1} parent=5 // pred_check_branch
        %1060 = sbr.rel (%p1058) target = $region88
      $region87: #{tpu_custom_call.1} parent=5 // pred_region
        %s1061 = ssub.s32 %s26, 2
        // Predicated region
        $region89: #{tpu_custom_call.1} parent=87 // pred_check
          %p1062 = pneg %p254
        $region90: #{tpu_custom_call.1} parent=87 // pred_check_branch
          %1064 = sbr.rel (%p1062) target = $region92
        $region91: #{tpu_custom_call.1} parent=87 // pred_region
          %s1065 = sand.u32 %s239, 1
          %s1066 = scalar_lea.sflag [#allocation4], %s1065
          %s1067 = sand.u32 %s239, 1
          %s1068 = smul.addr %s1067, 8
          %s1069 = scalar_lea.vmem [#allocation13], %s1068
          %1070 = dma.done %s1066, 128
        $region92: #{tpu_custom_call.1} parent=87 // pred_fallthru
          _
      $region88: #{tpu_custom_call.1} parent=5 // pred_fallthru
        _
    $region6: #{tpu_custom_call.1} parent=1 // loop_footer
      %s30 = sadd.s32 1, %s26
    $region7: #{tpu_custom_call.1} parent=1 // loop_footer_branch
      %25 = sbr.rel target = $region3
    $region8: #{tpu_custom_call.1} parent=1 // loop_exit
      _
    %1071 = vsyncpa [#allocation3], 1
    %s1072 = scalar_lea.sflag [#allocation3], 1
    %1073 = vsyncpa %s1072, 1
    %1074 = vsyncpa [#allocation6], 1
    %s1075 = scalar_lea.sflag [#allocation6], 1
    %1076 = vsyncpa %s1075, 1
    %1077 = vsyncpa [#allocation9], 1
    %1078 = vsyncpa [#allocation12], 1
    %1079 = vsyncpa [#allocation4], 1
    %s1080 = scalar_lea.sflag [#allocation4], 1
    %1081 = vsyncpa %s1080, 1

</llo_original>
